<compile_context>
chip_gen: v5e
topology: v5e:2x2
jax: 0.10.0
libtpu: 0.0.40
codegen_flags: <defaults>
</compile_context>

<pallas_src>
import jax
import jax.numpy as jnp
from jax.experimental import pallas as pl
from jax.experimental.pallas import tpu as pltpu


# --------------------------------------------------------------------------
# Kernels
# --------------------------------------------------------------------------
def _profile_logit_scaling_kernel(x_ref, o_ref):
    # x_ref / o_ref: (tile_rows, L) block in VMEM.
    x = x_ref[...]
    xf = x.astype(jnp.float32)
    # Numerically-stable softmax along the last (lane) axis, f32 accumulation.
    m = jnp.max(xf, axis=-1, keepdims=True)
    e = jnp.exp(xf - m)
    s = jnp.sum(e, axis=-1, keepdims=True)
    sm = e / s  # exact division: kernel is HBM-bound, exactness is free
    if o_ref.dtype == jnp.float32:
        o_ref[...] = xf * sm
    else:
        # Sub-f32 inputs: do the final multiply in the native dtype so we do
        # not keep a second block-sized f32 temp live (helps v7x's 64 MiB
        # VMEM); bf16 VALU on v6e/v7x makes this free.
        o_ref[...] = x * sm.astype(o_ref.dtype)


def _profile_logit_scaling_bwd_kernel(g_ref, x_ref, dx_ref):
    # dL/dx = g * softmax(x)   (softmax factor is detached in the forward)
    xf = x_ref[...].astype(jnp.float32)
    m = jnp.max(xf, axis=-1, keepdims=True)
    e = jnp.exp(xf - m)
    sm = e / jnp.sum(e, axis=-1, keepdims=True)
    dx_ref[...] = (g_ref[...].astype(jnp.float32) * sm).astype(dx_ref.dtype)


# --------------------------------------------------------------------------
# Tiling / VMEM sizing helpers
# --------------------------------------------------------------------------
def _round_up(v, m):
    return ((v + m - 1) // m) * m


def _vmem_budget():
    """(target_block_bytes, vmem_limit_bytes, physical_vmem_or_None),
    keyed off the TPU generation."""
    try:
        phys = pltpu.get_tpu_info().vmem_capacity_bytes
    except Exception:
        phys = None
    if phys is None:
        # Unknown chip (e.g. interpret mode): conservative, safe everywhere.
        return 2 << 20, 32 << 20, None
    if phys <= (64 << 20):
        # v7x-class: 64 MiB VMEM per TensorCore -> cap blocks at ~4 MiB.
        return 4 << 20, 48 << 20, phys
    # v5e / v6e: 128 MiB physical VMEM -> ~8 MiB blocks amortize the
    # ~0.35 us/step grid overhead; explicit limit mandatory on v5e (16 MiB
    # scoped default).
    return 8 << 20, 96 << 20, phys


def _choose_tile_rows(B, L, itemsize, target_bytes):
    """Batch-tile so each block is ~target_bytes, respecting sublane packing
    (8 rows f32 / 16 bf16 / 32 int8)."""
    row_mult = {4: 8, 2: 16, 1: 32}.get(itemsize, 8)
    tr = max(target_bytes // max(L * itemsize, 1), row_mult)
    tr = max((tr // row_mult) * row_mult, row_mult)
    tr = min(tr, _round_up(B, row_mult))
    # Prefer an even (>=2) number of grid steps for small grids so v7x's two
    # TensorCores split the 'parallel' axis evenly (harmless on v5e/v6e).
    steps = pl.cdiv(B, tr)
    if steps <= 8 and steps % 2 == 1 and B > row_mult:
        tr2 = _round_up(pl.cdiv(B, steps + 1), row_mult)
        if tr2 >= row_mult and pl.cdiv(B, tr2) % 2 == 0:
            tr = tr2
    return tr


def _row_slab_call(kernel, arrays, out_dtype, n_f32_temps=2):
    """Run `kernel` over (B, L) arrays tiled as contiguous row slabs."""
    B, L = arrays[0].shape
    itemsize = max(jnp.dtype(a.dtype).itemsize for a in arrays)
    target_bytes, vmem_limit, phys = _vmem_budget()
    tile_rows = _choose_tile_rows(B, L, itemsize, target_bytes)

    # Budget check including double-buffered in/out blocks and the f32 temps
    # (upcast x / exp) the kernel materializes; raise the limit for large-L
    # rows instead of silently OOM-ing.
    bb = tile_rows * L
    est = sum(2 * bb * jnp.dtype(a.dtype).itemsize for a in arrays)
    est += 2 * bb * jnp.dtype(out_dtype).itemsize
    est += n_f32_temps * bb * 4
    if est > vmem_limit:
        vmem_limit = est + (2 << 20)
        if phys is not None:
            vmem_limit = min(vmem_limit, (phys * 9) // 10)
    # TODO(synk): vocab-scale L where even one minimum slab + temps exceeds
    # physical VMEM would need a two-pass/online softmax tiled along L.

    spec = pl.BlockSpec((tile_rows, L), lambda i: (i, 0))
    # Ragged last block: no jnp.pad / out[:B] extra HBM passes.  Out-of-bounds
    # rows in the final block contain garbage (exp may yield inf/NaN there),
    # but rows are independent and those stores are masked, so results are
    # unaffected.  Do not "fix" this by padding.
    grid = (pl.cdiv(B, tile_rows),)

    return pl.pallas_call(
        kernel,
        out_shape=jax.ShapeDtypeStruct((B, L), out_dtype),
        grid_spec=pltpu.PrefetchScalarGridSpec(
            num_scalar_prefetch=0,
            grid=grid,
            in_specs=[spec] * len(arrays),
            out_specs=spec,
        ),
        compiler_params=pltpu.CompilerParams(
            dimension_semantics=("parallel",),
            vmem_limit_bytes=int(vmem_limit),
        ),
    )(*arrays)


# --------------------------------------------------------------------------
# Public op with the PyTorch module's autograd semantics
# --------------------------------------------------------------------------
@jax.custom_vjp
def profile_logit_scaling(logits):
    return _row_slab_call(_profile_logit_scaling_kernel, (logits,), logits.dtype)


def _pls_fwd(logits):
    return profile_logit_scaling(logits), logits


def _pls_bwd(logits, g):
    dx = _row_slab_call(
        _profile_logit_scaling_bwd_kernel, (g, logits), logits.dtype
    )
    return (dx,)


profile_logit_scaling.defvjp(_pls_fwd, _pls_bwd)


def _reference(logits):
    y = jax.nn.log_softmax(logits.astype(jnp.float32), axis=-1)
    return (logits.astype(jnp.float32) * jnp.exp(y)).astype(logits.dtype)


if __name__ == "__main__":
    key = jax.random.PRNGKey(0)
    # BPNet-style logits: (batch, output_length).  Batch deliberately not a
    # multiple of 8 to exercise the ragged-last-block path.
    B, L = 10, 256
    logits = jax.random.normal(key, (B, L), dtype=jnp.float32)

    out = jax.block_until_ready(profile_logit_scaling(logits))
    ref = _reference(logits)
    assert out.shape == (B, L)
    assert jnp.allclose(out, ref, atol=1e-5, rtol=1e-4), "forward mismatch"

    # Backward: gradient only flows through the bare logits factor.
    grad = jax.block_until_ready(
        jax.grad(lambda x: jnp.sum(profile_logit_scaling(x)))(logits)
    )
    grad_ref = jax.nn.softmax(logits.astype(jnp.float32), axis=-1)
    assert jnp.allclose(grad, grad_ref, atol=1e-5, rtol=1e-4), "backward mismatch"

    print("KERNEL_OK")
</pallas_src>

<mosaic_0001>
module attributes {stable_mosaic.version = 11 : i64} {
  func.func @_profile_logit_scaling_kernel(%arg0: i32, %arg1: memref<8x256xf32, #tpu.memory_space<vmem>>, %arg2: memref<8x256xf32, #tpu.memory_space<vmem>>) attributes {dimension_semantics = [#tpu.dimension_semantics<parallel>], iteration_bounds = array<i64: 2>, scalar_prefetch = 0 : i64, scratch_operands = 0 : i64, tpu.core_type = #tpu.core_type<tc>, window_params = [{transform_indices = @transform_0, window_bounds = array<i64: 8, 256>}, {transform_indices = @transform_1, window_bounds = array<i64: 8, 256>}]} {
    %c0 = arith.constant 0 : index
    %c0_0 = arith.constant 0 : index
    %0 = vector.load %arg1[%c0, %c0_0] : memref<8x256xf32, #tpu.memory_space<vmem>>, vector<8x256xf32>
    %cst = arith.constant dense<0xFF800000> : vector<8xf32>
    %1 = vector.multi_reduction <maximumf>, %0, %cst [1] : vector<8x256xf32> to vector<8xf32>
    %2 = vector.shape_cast %1 : vector<8xf32> to vector<8x1xf32>
    %3 = vector.broadcast %2 : vector<8x1xf32> to vector<8x256xf32>
    %4 = arith.subf %0, %3 : vector<8x256xf32>
    %5 = math.exp %4 : vector<8x256xf32>
    %cst_1 = arith.constant dense<0.000000e+00> : vector<8xf32>
    %6 = vector.multi_reduction <add>, %5, %cst_1 [1] : vector<8x256xf32> to vector<8xf32>
    %7 = vector.shape_cast %6 : vector<8xf32> to vector<8x1xf32>
    %8 = vector.broadcast %7 : vector<8x1xf32> to vector<8x256xf32>
    %9 = arith.divf %5, %8 : vector<8x256xf32>
    %10 = arith.mulf %0, %9 : vector<8x256xf32>
    %c0_2 = arith.constant 0 : index
    %c0_3 = arith.constant 0 : index
    %11 = vector.load %arg2[%c0_2, %c0_3] : memref<8x256xf32, #tpu.memory_space<vmem>>, vector<8x256xf32>
    tpu.vector_store %arg2[%c0_2, %c0_3], %10 {strides = array<i32>} : memref<8x256xf32, #tpu.memory_space<vmem>>, vector<8x256xf32>,
    return
  }
  func.func @transform_0(%arg0: i32) -> (i32, i32) {
    %c0_i32 = arith.constant 0 : i32
    %c0_i32_0 = arith.constant 0 : i32
    return %arg0, %c0_i32 : i32, i32
  }
  func.func @transform_1(%arg0: i32) -> (i32, i32) {
    %c0_i32 = arith.constant 0 : i32
    %c0_i32_0 = arith.constant 0 : i32
    return %arg0, %c0_i32 : i32, i32
  }
}

</mosaic_0001>

<llo_original>
// kernel: tpu_custom_call.1
$region0: #{tpu_custom_call.1}
  #allocation0 [shape = 'u32[]', space=smem, size = 0x4, offset = 0x4, fixed_abs, tag = 'smem constant byte address 0x4 - core index']
  #allocation1 [shape = 'u32[72,128]{1,0:T(1,128)}', space=vmem, size = 0x9000, scoped, tag = 'internal scratch']
  %s0 = inlined_call_operand.hbm [shape: f32[10,256], index: 0, kind: input, shape index: {}]
  %s1 = inlined_call_operand.hbm [shape: f32[10,256], index: 1, kind: output, shape index: {}]
  %s2 = sld [smem:[#allocation0]]
  $region41: #{tpu_custom_call.1} parent=0
    _
  %s4 = ssub.s32 1, %s2
  %s5 = scalar_select 0, %s4, %s2
  $region1: #{tpu_custom_call.1} parent=0
    #allocation2 [shape = 'u8[16384]{0}', space=vmem, size = 0x4000, scoped, tag = 'input window, operand 0']
    #allocation3 [shape = 's32[2]{0}', space=sflag, size = 0x8, scoped, tag = 'scoped memory for tpu_custom_call.1']
    #allocation4 [shape = 's32[2]{0}', space=sflag, size = 0x8, scoped, tag = 'scoped memory for tpu_custom_call.1']
    #allocation5 [shape = 'u8[16384]{0}', space=vmem, size = 0x4000, scoped, tag = 'output window, operand 0']
    %6 = vsyncpa [#allocation3], 0
    %s7 = scalar_lea.sflag [#allocation3], 1
    %8 = vsyncpa %s7, 0
    %9 = vsyncpa [#allocation4], 0
    %s10 = scalar_lea.sflag [#allocation4], 1
    %11 = vsyncpa %s10, 0
    loop: start=0, step=1, limit=4
    $region2: #{tpu_custom_call.1} parent=1 // loop_pre_header
      _
    $region3: #{tpu_custom_call.1} parent=1 // loop_header
      %s13 = sphi 0, %s17
      %p14 = scmp.ge.s32.totalorder %s13, 4
      %s23 = sphi 0, %s25
      %s26 = sphi 0, %s23
      %s27 = sphi 0, %s26
      %s43 = sphi 0, %s27
      %s49 = sphi 0, %s51
      %s52 = sphi 0, %s49
      %s53 = sphi 0, %s52
      %s69 = sphi 0, %s53
    $region4: #{tpu_custom_call.1} parent=1 // loop_header_branch
      %16 = sbr.rel (%p14) target = $region8
    $region5: #{tpu_custom_call.1} parent=1 // loop_body
      %s18 = ssub.s32 %s13, 1
      %s19 = ssub.s32 %s13, 2
      %s20 = sadd.s32 %s13, 1
      %s21 = ssub.s32 %s13, %s20
      %p22 = scmp.eq.s32.totalorder %s21, 0
      %s24 = sadd.s32 %s23, 1
      %s25 = scalar_select %p22, %s23, %s24
      %p28 = pneg %p22
      %p29 = scmp.eq.s32.totalorder %s13, 1
      %p30 = por %p28, %p29
      %p31 = scmp.ne.s32.totalorder %s23, %s26
      %p32 = scmp.eq.s32.totalorder %s13, 0
      %p33 = por %p31, %p32
      %p34 = scmp.ne.s32.totalorder %s23, %s26
      %p35 = scmp.eq.s32.totalorder %s18, 1
      %p36 = por %p34, %p35
      %p37 = scmp.ne.s32.totalorder %s26, %s27
      %p38 = scmp.eq.s32.totalorder %s18, 0
      %p39 = por %p37, %p38
      %p40 = scmp.ne.s32.totalorder %s26, %s27
      %p41 = scmp.eq.s32.totalorder %s19, 1
      %p42 = por %p40, %p41
      %p44 = scmp.ne.s32.totalorder %s27, %s43
      %p45 = scmp.eq.s32.totalorder %s19, 0
      %p46 = por %p44, %p45
      %s47 = ssub.s32 %s13, %s20
      %p48 = scmp.eq.s32.totalorder %s47, 0
      %s50 = sadd.s32 %s49, 1
      %s51 = scalar_select %p48, %s49, %s50
      %p54 = pneg %p48
      %p55 = scmp.eq.s32.totalorder %s13, 1
      %p56 = por %p54, %p55
      %p57 = scmp.ne.s32.totalorder %s49, %s52
      %p58 = scmp.eq.s32.totalorder %s13, 0
      %p59 = por %p57, %p58
      %p60 = scmp.ne.s32.totalorder %s49, %s52
      %p61 = scmp.eq.s32.totalorder %s18, 1
      %p62 = por %p60, %p61
      %p63 = scmp.ne.s32.totalorder %s52, %s53
      %p64 = scmp.eq.s32.totalorder %s18, 0
      %p65 = por %p63, %p64
      %p66 = scmp.ne.s32.totalorder %s52, %s53
      %p67 = scmp.eq.s32.totalorder %s19, 1
      %p68 = por %p66, %p67
      %p70 = scmp.ne.s32.totalorder %s53, %s69
      %p71 = scmp.eq.s32.totalorder %s19, 0
      %p72 = por %p70, %p71
      %p73 = scmp.le.s32.totalorder 1, %s13
      %p74 = scmp.lt.s32.totalorder %s13, 3
      %p75 = pnand %p73, %p74
      %p76 = pneg %p75
      // Predicated region
      $region9: #{tpu_custom_call.1} parent=5 // pred_check
        _
      $region10: #{tpu_custom_call.1} parent=5 // pred_check_branch
        %78 = sbr.rel (%p75) target = $region12
      $region11: #{tpu_custom_call.1} parent=5 // pred_region
        %s79 = ssub.s32 %s13, 1
      $region12: #{tpu_custom_call.1} parent=5 // pred_fallthru
        _
      %p80 = scmp.lt.s32.totalorder %s13, 2
      // Predicated region
      $region13: #{tpu_custom_call.1} parent=5 // pred_check
        %p81 = pneg %p80
      $region14: #{tpu_custom_call.1} parent=5 // pred_check_branch
        %83 = sbr.rel (%p81) target = $region16
      $region15: #{tpu_custom_call.1} parent=5 // pred_region
        // Predicated region
        $region17: #{tpu_custom_call.1} parent=15 // pred_check
          %p84 = pneg %p33
        $region18: #{tpu_custom_call.1} parent=15 // pred_check_branch
          %86 = sbr.rel (%p84) target = $region20
        $region19: #{tpu_custom_call.1} parent=15 // pred_region
          %s87 = sand.u32 %s23, 1
          %s88 = scalar_lea.sflag [#allocation3], %s87
          %s89 = sand.u32 %s23, 1
          %s90 = smul.addr %s89, 16
          %s91 = scalar_lea.vmem [#allocation2], %s90
          %93 = vsyncadd %s88, 0
          %s94 = smul.addr %s13, 2
          %s95 = smul.addr %s94, 8
          %s96 = scalar_lea.hbm %s0, %s95
          %s98 = sshll.u32 %s96, 4
          %s99 = int_to_ptr.hbm [resolvable:$true] %s98
          %s100 = sshll.u32 %s91, 4
          %s101 = int_to_ptr.vmem [resolvable:$true] %s100
          %103 = dma.hbm_to_vmem [thread:$0]  %s99, 256, %s101, %s88
        $region20: #{tpu_custom_call.1} parent=15 // pred_fallthru
          _
      $region16: #{tpu_custom_call.1} parent=5 // pred_fallthru
        _
      %p104 = scmp.le.s32.totalorder 1, %s13
      %p105 = scmp.lt.s32.totalorder %s13, 3
      %p106 = pnand %p104, %p105
      %p107 = pneg %p106
      // Predicated region
      $region21: #{tpu_custom_call.1} parent=5 // pred_check
        _
      $region22: #{tpu_custom_call.1} parent=5 // pred_check_branch
        %109 = sbr.rel (%p106) target = $region24
      $region23: #{tpu_custom_call.1} parent=5 // pred_region
        %s110 = ssub.s32 %s13, 1
        %s111 = sand.u32 %s26, 1
        %s112 = scalar_lea.sflag [#allocation3], %s111
        %s113 = sand.u32 %s26, 1
        %s114 = smul.addr %s113, 16
        %s115 = scalar_lea.vmem [#allocation2], %s114
        // Predicated region
        $region25: #{tpu_custom_call.1} parent=23 // pred_check
          %p116 = pneg %p39
        $region26: #{tpu_custom_call.1} parent=23 // pred_check_branch
          %118 = sbr.rel (%p116) target = $region28
        $region27: #{tpu_custom_call.1} parent=23 // pred_region
          %120 = dma.done %s112, 256
        $region28: #{tpu_custom_call.1} parent=23 // pred_fallthru
          _
        %s121 = sand.u32 %s26, 1
        %s122 = scalar_lea.sflag [#allocation3], %s121
        %s123 = sand.u32 %s26, 1
        %s124 = smul.addr %s123, 16
        %s125 = scalar_lea.vmem [#allocation2], %s124
        %p126 = pneg %p39
        %p127 = pneg %p36
        %p128 = pneg %p65
        %p129 = pneg %p62
        %s130 = sand.u32 %s52, 1
        %s131 = scalar_lea.sflag [#allocation4], %s130
        %s132 = sand.u32 %s52, 1
        %s133 = smul.addr %s132, 16
        %s134 = scalar_lea.vmem [#allocation5], %s133
        %v135 = vld [vmem:[%s115] sm:$0xff]
        %v136 = vld [vmem:[%s115 + $0x8] sm:$0xff]
        %v137 = vmax.f32 %v135, %v136
        %138 = vmax.xlane.f32.xlu0 %v137
        %v139 = vpop.xlane.xlu0 %138
        %v140 = vsub.f32 %v135, %v139
        %v141 = vsub.f32 %v136, %v139
        %v142 = vmul.f32 %v140, 1.442695
        %v143 = vpow.pop %v142
        %v144 = vmul.f32 %v141, 1.442695
        %v145 = vpow.pop %v144
        %v146 = vadd.f32 %v143, %v145
        %147 = vadd.xlane.f32.xlu0 %v146
        %v148 = vpop.xlane.xlu0 %147
        %v149 = vrcp.pop %v148
        %v150 = vmul.f32 %v148, %v149
        %v151 = vsub.f32 1.0, %v150
        %v152 = vmul.f32 %v149, %v151
        %v153 = vadd.f32 %v149, %v152
        %vm154 = vweird.f32 %v148
        %vm155 = vweird.f32 %v149
        %vm156 = vmor %vm154, %vm155
        %v157 = vsel %vm156, %v149, %v153
        %v158 = vand.u32 2147483647, %v148
        %vm159 = vcmp.eq.f32.partialorder %v158, 8.507059e+37
        %v160 = vand.u32 %v148, 2147483648
        %v161 = vor.u32 1.1754944e-38, %v160
        %v162 = vsel %vm159, %v161, %v157
        %v163 = vmul.f32 %v143, %v162
        %v164 = vmul.f32 %v145, %v162
        %v165 = vmul.f32 %v135, %v163
        %v166 = vmul.f32 %v136, %v164
        %167 = vst [vmem:[%s134] sm:$0xff] %v165
        %168 = vst [vmem:[%s134 + $0x8] sm:$0xff] %v166
        %s169 = sand.u32 %s52, 1
        %s170 = scalar_lea.sflag [#allocation4], %s169
        %s171 = sand.u32 %s52, 1
        %s172 = smul.addr %s171, 16
        %s173 = scalar_lea.vmem [#allocation5], %s172
        // Predicated region
        $region29: #{tpu_custom_call.1} parent=23 // pred_check
          %p174 = pneg %p62
        $region30: #{tpu_custom_call.1} parent=23 // pred_check_branch
          %176 = sbr.rel (%p174) target = $region32
        $region31: #{tpu_custom_call.1} parent=23 // pred_region
          %178 = vsyncadd %s170, 0
          %s179 = smul.addr %s18, 2
          %s180 = smul.addr %s179, 8
          %s181 = scalar_lea.hbm %s1, %s180
          %s183 = sshll.u32 %s173, 4
          %s184 = int_to_ptr.vmem [resolvable:$true] %s183
          %s185 = sshll.u32 %s181, 4
          %s186 = int_to_ptr.hbm [resolvable:$true] %s185
          %188 = dma.vmem_to_hbm [thread:$0]  %s184, 256, %s186, %s170
        $region32: #{tpu_custom_call.1} parent=23 // pred_fallthru
          _
      $region24: #{tpu_custom_call.1} parent=5 // pred_fallthru
        _
      %p189 = scmp.le.s32.totalorder 2, %s13
      // Predicated region
      $region33: #{tpu_custom_call.1} parent=5 // pred_check
        %p190 = pneg %p189
      $region34: #{tpu_custom_call.1} parent=5 // pred_check_branch
        %192 = sbr.rel (%p190) target = $region36
      $region35: #{tpu_custom_call.1} parent=5 // pred_region
        %s193 = ssub.s32 %s13, 2
        // Predicated region
        $region37: #{tpu_custom_call.1} parent=35 // pred_check
          %p194 = pneg %p68
        $region38: #{tpu_custom_call.1} parent=35 // pred_check_branch
          %196 = sbr.rel (%p194) target = $region40
        $region39: #{tpu_custom_call.1} parent=35 // pred_region
          %s197 = sand.u32 %s53, 1
          %s198 = scalar_lea.sflag [#allocation4], %s197
          %s199 = sand.u32 %s53, 1
          %s200 = smul.addr %s199, 16
          %s201 = scalar_lea.vmem [#allocation5], %s200
          %203 = dma.done %s198, 256
        $region40: #{tpu_custom_call.1} parent=35 // pred_fallthru
          _
      $region36: #{tpu_custom_call.1} parent=5 // pred_fallthru
        _
    $region6: #{tpu_custom_call.1} parent=1 // loop_footer
      %s17 = sadd.s32 1, %s13
    $region7: #{tpu_custom_call.1} parent=1 // loop_footer_branch
      %12 = sbr.rel target = $region3
    $region8: #{tpu_custom_call.1} parent=1 // loop_exit
      _
    %204 = vsyncpa [#allocation3], 1
    %s205 = scalar_lea.sflag [#allocation3], 1
    %206 = vsyncpa %s205, 1
    %207 = vsyncpa [#allocation4], 1
    %s208 = scalar_lea.sflag [#allocation4], 1
    %209 = vsyncpa %s208, 1

</llo_original>
